<compile_context>
chip_gen: v7x
topology: tpu7x:2x2x1
jax: 0.10.0
libtpu: 0.0.40
codegen_flags: <defaults>
</compile_context>

<pallas_src>
import math
from functools import partial

import jax
import jax.numpy as jnp
from jax.experimental import pallas as pl
from jax.experimental.pallas import tpu as pltpu


def _round_up(x: int, m: int) -> int:
    return ((x + m - 1) // m) * m


def _lstm_cell_kernel(x_ref, h_ref, c_ref, wih_ref, whh_ref, b_ref,
                      h1_ref, c1_ref, i_ref, f_ref, g_ref, o_ref):
    """One batch tile of the LSTM cell, fully VMEM-resident.

    gates = x @ W_ih^T + h @ W_hh^T + (b_ih + b_hh)      -> [TB, 4H], f32 accum
    i, f, g, o = chunk(gates, 4, axis=1)                  (pre-activations)
    c1 = c0 * sigmoid(f) + sigmoid(i) * tanh(g)
    h1 = sigmoid(o) * tanh(c1)
    """
    hidden = c_ref.shape[1]

    # Two MXU matmuls sharing one f32 accumulator; bias folded once (f32 add).
    gates = (
        jnp.dot(x_ref[...], wih_ref[...], preferred_element_type=jnp.float32)
        + jnp.dot(h_ref[...], whh_ref[...], preferred_element_type=jnp.float32)
        + b_ref[...]
    )  # [TB, 4H], f32

    # Gate slices (free views when H is a multiple of 128; cheap relayout at
    # the demo's H=32).
    i_pre = gates[:, 0 * hidden:1 * hidden]
    f_pre = gates[:, 1 * hidden:2 * hidden]
    g_pre = gates[:, 2 * hidden:3 * hidden]
    o_pre = gates[:, 3 * hidden:4 * hidden]

    # Pre-activation gates are kernel outputs -> written to HBM exactly once.
    i_ref[...] = i_pre
    f_ref[...] = f_pre
    g_ref[...] = g_pre
    o_ref[...] = o_pre

    # Elementwise / transcendental math in f32 (v5e has no bf16 VPU/EUP).
    c_1 = c_ref[...] * jax.nn.sigmoid(f_pre) + jax.nn.sigmoid(i_pre) * jnp.tanh(g_pre)
    h_1 = jax.nn.sigmoid(o_pre) * jnp.tanh(c_1)

    c1_ref[...] = c_1
    h1_ref[...] = h_1


def prepare_lstm_params(w_ih, w_hh, b_ih, b_hh, matmul_dtype=jnp.float32):
    """One-time parameter layout glue (hoisted out of any per-step loop).

    Returns:
      w_ih_t:  [I, 4H] in `matmul_dtype`   (x_t @ w_ih_t  == x_t @ W_ih^T)
      w_hh_t:  [H, 4H] in `matmul_dtype`
      b_fused: [1, 4H] f32 (b_ih + b_hh folded once)

    bf16 `matmul_dtype` is a fast path on v5e, v6e and v7x alike (the MXU is
    natively bf16 on all of them); accumulation and elementwise math stay f32.
    """
    w_ih_t = jnp.transpose(w_ih).astype(matmul_dtype)     # [I, 4H]
    w_hh_t = jnp.transpose(w_hh).astype(matmul_dtype)     # [H, 4H]
    b_fused = (b_ih.astype(jnp.float32) + b_hh.astype(jnp.float32)).reshape(1, -1)
    return w_ih_t, w_hh_t, b_fused


@partial(jax.jit, static_argnames=("block_b",))
def lstm_cell_forward(x_t, h_0, c_0, w_ih_t, w_hh_t, b_fused, *, block_b=1024):
    """Pallas forward of _LSTMCell. Returns the same dict as the torch module."""
    B, input_size = x_t.shape
    hidden_size = h_0.shape[1]
    four_h = 4 * hidden_size
    matmul_dtype = w_ih_t.dtype

    # Only the matmul operands take the (possibly bf16) matmul dtype; these
    # casts are no-ops on the default f32 path.
    x = x_t.astype(matmul_dtype)
    h = h_0.astype(matmul_dtype)
    c = c_0.astype(jnp.float32)

    # Batch tile: sublane-aligned (multiple of 8), capped at block_b, and sized
    # so the grid has >= 2 steps whenever possible (v7x shards the "parallel"
    # batch axis across its 2 TensorCores). No pre-padding: Pallas masks the
    # partial last block.
    tb = max(8, min(_round_up(block_b, 8), _round_up(pl.cdiv(B, 2), 8)))
    grid = (pl.cdiv(B, tb),)

    state_shape = jax.ShapeDtypeStruct((B, hidden_size), jnp.float32)
    out_shapes = (state_shape,) * 6                       # h_n, c_n, i, f, g, o

    batch_block = lambda cols: pl.BlockSpec((tb, cols), lambda b: (b, 0))

    outs = pl.pallas_call(
        _lstm_cell_kernel,
        out_shape=out_shapes,
        grid=grid,
        in_specs=[
            # Batch-tiled activations / state (double-buffered by the pipeline).
            batch_block(input_size),                          # x_t
            batch_block(hidden_size),                         # h_0
            batch_block(hidden_size),                         # c_0
            # Parameters: constant index_map -> VMEM-resident across the grid.
            pl.BlockSpec((input_size, four_h), lambda b: (0, 0)),   # w_ih^T
            pl.BlockSpec((hidden_size, four_h), lambda b: (0, 0)),  # w_hh^T
            pl.BlockSpec((1, four_h), lambda b: (0, 0)),            # bias
        ],
        out_specs=tuple(batch_block(hidden_size) for _ in range(6)),
        compiler_params=pltpu.CompilerParams(
            dimension_semantics=("parallel",),        # megacore sharding on v7x
            # 64 MiB fits every generation's physical VMEM (v7x: 64 MiB total);
            # on v5e/v6e (128 MiB) this can be raised further for larger tiles.
            vmem_limit_bytes=64 * 1024 * 1024,
        ),
    )(x, h, c, w_ih_t, w_hh_t, b_fused)

    h_n, c_n, i, f, g, o = outs
    return {'h_n': h_n, 'c_n': c_n, 'i': i, 'f': f, 'g': g, 'o': o}


def init_lstm_cell_params(key, input_size, hidden_size, initial_forget_bias=0.0):
    """Deterministic synthetic init mirroring _LSTMCell._reset_parameters."""
    stdv = math.sqrt(3.0 / hidden_size)
    k_hh, k_ih = jax.random.split(key)
    w_hh = jax.random.uniform(k_hh, (4 * hidden_size, hidden_size),
                              minval=-stdv, maxval=stdv, dtype=jnp.float32)
    w_ih = jax.random.uniform(k_ih, (4 * hidden_size, input_size),
                              minval=-stdv, maxval=stdv, dtype=jnp.float32)
    b_hh = jnp.zeros((4 * hidden_size,), dtype=jnp.float32)
    b_ih = jnp.zeros((4 * hidden_size,), dtype=jnp.float32)
    if initial_forget_bias != 0.0:
        b_hh = b_hh.at[hidden_size:2 * hidden_size].set(initial_forget_bias)
    return w_ih, w_hh, b_ih, b_hh


def _reference_forward(x_t, h_0, c_0, w_ih, w_hh, b_ih, b_hh):
    """Plain-JAX reference of the torch forward (for correctness check)."""
    gates = h_0 @ w_hh.T + b_hh + x_t @ w_ih.T + b_ih
    H = h_0.shape[1]
    i, f, g, o = (gates[:, 0:H], gates[:, H:2 * H],
                  gates[:, 2 * H:3 * H], gates[:, 3 * H:4 * H])
    c_1 = c_0 * jax.nn.sigmoid(f) + jax.nn.sigmoid(i) * jnp.tanh(g)
    h_1 = jax.nn.sigmoid(o) * jnp.tanh(c_1)
    return {'h_n': h_1, 'c_n': c_1, 'i': i, 'f': f, 'g': g, 'o': o}


if __name__ == "__main__":
    batch = 8
    input_size = 16
    hidden_size = 32
    initial_forget_bias = 3.0

    key = jax.random.PRNGKey(0)
    k_param, k_x, k_h, k_c = jax.random.split(key, 4)

    w_ih, w_hh, b_ih, b_hh = init_lstm_cell_params(
        k_param, input_size, hidden_size, initial_forget_bias)

    x_t = jax.random.normal(k_x, (batch, input_size), dtype=jnp.float32)
    h_0 = jax.random.normal(k_h, (batch, hidden_size), dtype=jnp.float32)
    c_0 = jax.random.normal(k_c, (batch, hidden_size), dtype=jnp.float32)

    ref = _reference_forward(x_t, h_0, c_0, w_ih, w_hh, b_ih, b_hh)
    names = ('h_n', 'c_n', 'i', 'f', 'g', 'o')

    # ---- f32 matmul path (matches torch numerics) ----
    p_f32 = prepare_lstm_params(w_ih, w_hh, b_ih, b_hh, jnp.float32)
    out = lstm_cell_forward(x_t, h_0, c_0, *p_f32)
    out = jax.tree_util.tree_map(jax.block_until_ready, out)
    for name in names:
        assert out[name].shape == ref[name].shape, name
        assert jnp.allclose(out[name], ref[name], atol=1e-5, rtol=1e-5), name

    # ---- bf16 matmul-operand path (fast path on v5e/v6e/v7x alike; f32 accum
    #      and f32 elementwise either way) ----
    p_bf16 = prepare_lstm_params(w_ih, w_hh, b_ih, b_hh, jnp.bfloat16)
    out_bf = lstm_cell_forward(x_t, h_0, c_0, *p_bf16)
    out_bf = jax.tree_util.tree_map(jax.block_until_ready, out_bf)
    for name in names:
        assert out_bf[name].shape == ref[name].shape, name
        assert jnp.allclose(out_bf[name], ref[name], atol=1e-1, rtol=1e-1), name

    print("KERNEL_OK")
</pallas_src>

<mosaic_0001>
module attributes {stable_mosaic.version = 11 : i64} {
  func.func @_lstm_cell_kernel(%arg0: i32, %arg1: memref<8x16xf32, #tpu.memory_space<vmem>>, %arg2: memref<8x32xf32, #tpu.memory_space<vmem>>, %arg3: memref<8x32xf32, #tpu.memory_space<vmem>>, %arg4: memref<16x128xf32, #tpu.memory_space<vmem>>, %arg5: memref<32x128xf32, #tpu.memory_space<vmem>>, %arg6: memref<1x128xf32, #tpu.memory_space<vmem>>, %arg7: memref<8x32xf32, #tpu.memory_space<vmem>>, %arg8: memref<8x32xf32, #tpu.memory_space<vmem>>, %arg9: memref<8x32xf32, #tpu.memory_space<vmem>>, %arg10: memref<8x32xf32, #tpu.memory_space<vmem>>, %arg11: memref<8x32xf32, #tpu.memory_space<vmem>>, %arg12: memref<8x32xf32, #tpu.memory_space<vmem>>) attributes {dimension_semantics = [#tpu.dimension_semantics<parallel>], iteration_bounds = array<i64: 1>, scalar_prefetch = 0 : i64, scratch_operands = 0 : i64, tpu.core_type = #tpu.core_type<tc>, window_params = [{transform_indices = @transform_0, window_bounds = array<i64: 8, 16>}, {transform_indices = @transform_1, window_bounds = array<i64: 8, 32>}, {transform_indices = @transform_2, window_bounds = array<i64: 8, 32>}, {pipeline_mode = #tpu.pipeline_mode<synchronous>, transform_indices = @transform_3, window_bounds = array<i64: 16, 128>}, {pipeline_mode = #tpu.pipeline_mode<synchronous>, transform_indices = @transform_4, window_bounds = array<i64: 32, 128>}, {pipeline_mode = #tpu.pipeline_mode<synchronous>, transform_indices = @transform_5, window_bounds = array<i64: 1, 128>}, {transform_indices = @transform_6, window_bounds = array<i64: 8, 32>}, {transform_indices = @transform_7, window_bounds = array<i64: 8, 32>}, {transform_indices = @transform_8, window_bounds = array<i64: 8, 32>}, {transform_indices = @transform_9, window_bounds = array<i64: 8, 32>}, {transform_indices = @transform_10, window_bounds = array<i64: 8, 32>}, {transform_indices = @transform_11, window_bounds = array<i64: 8, 32>}]} {
    %c0 = arith.constant 0 : index
    %c0_0 = arith.constant 0 : index
    %0 = vector.load %arg1[%c0, %c0_0] : memref<8x16xf32, #tpu.memory_space<vmem>>, vector<8x16xf32>
    %c0_1 = arith.constant 0 : index
    %c0_2 = arith.constant 0 : index
    %1 = vector.load %arg4[%c0_1, %c0_2] : memref<16x128xf32, #tpu.memory_space<vmem>>, vector<16x128xf32>
    %cst = arith.constant dense<0.000000e+00> : vector<8x128xf32>
    %2 = tpu.matmul %0, %1, %cst {dimension_numbers = #tpu.dot_dimension_numbers<[1], [0], [0], [1], [0, 0, 1, 1], [], []>} : vector<8x16xf32>, vector<16x128xf32>, vector<8x128xf32> -> vector<8x128xf32>
    %c0_3 = arith.constant 0 : index
    %c0_4 = arith.constant 0 : index
    %3 = vector.load %arg2[%c0_3, %c0_4] : memref<8x32xf32, #tpu.memory_space<vmem>>, vector<8x32xf32>
    %c0_5 = arith.constant 0 : index
    %c0_6 = arith.constant 0 : index
    %4 = vector.load %arg5[%c0_5, %c0_6] : memref<32x128xf32, #tpu.memory_space<vmem>>, vector<32x128xf32>
    %cst_7 = arith.constant dense<0.000000e+00> : vector<8x128xf32>
    %5 = tpu.matmul %3, %4, %cst_7 {dimension_numbers = #tpu.dot_dimension_numbers<[1], [0], [0], [1], [0, 0, 1, 1], [], []>} : vector<8x32xf32>, vector<32x128xf32>, vector<8x128xf32> -> vector<8x128xf32>
    %6 = arith.addf %2, %5 : vector<8x128xf32>
    %c0_8 = arith.constant 0 : index
    %c0_9 = arith.constant 0 : index
    %7 = vector.load %arg6[%c0_8, %c0_9] : memref<1x128xf32, #tpu.memory_space<vmem>>, vector<1x128xf32>
    %8 = vector.broadcast %7 : vector<1x128xf32> to vector<8x128xf32>
    %9 = arith.addf %6, %8 : vector<8x128xf32>
    %10 = vector.extract_strided_slice %9 {offsets = [0, 0], sizes = [8, 32], strides = [1, 1]} : vector<8x128xf32> to vector<8x32xf32>
    %11 = vector.extract_strided_slice %9 {offsets = [0, 32], sizes = [8, 32], strides = [1, 1]} : vector<8x128xf32> to vector<8x32xf32>
    %12 = vector.extract_strided_slice %9 {offsets = [0, 64], sizes = [8, 32], strides = [1, 1]} : vector<8x128xf32> to vector<8x32xf32>
    %13 = vector.extract_strided_slice %9 {offsets = [0, 96], sizes = [8, 32], strides = [1, 1]} : vector<8x128xf32> to vector<8x32xf32>
    %c0_10 = arith.constant 0 : index
    %c0_11 = arith.constant 0 : index
    %14 = vector.load %arg9[%c0_10, %c0_11] : memref<8x32xf32, #tpu.memory_space<vmem>>, vector<8x32xf32>
    tpu.vector_store %arg9[%c0_10, %c0_11], %10 {strides = array<i32>} : memref<8x32xf32, #tpu.memory_space<vmem>>, vector<8x32xf32>,
    %c0_12 = arith.constant 0 : index
    %c0_13 = arith.constant 0 : index
    %15 = vector.load %arg10[%c0_12, %c0_13] : memref<8x32xf32, #tpu.memory_space<vmem>>, vector<8x32xf32>
    tpu.vector_store %arg10[%c0_12, %c0_13], %11 {strides = array<i32>} : memref<8x32xf32, #tpu.memory_space<vmem>>, vector<8x32xf32>,
    %c0_14 = arith.constant 0 : index
    %c0_15 = arith.constant 0 : index
    %16 = vector.load %arg11[%c0_14, %c0_15] : memref<8x32xf32, #tpu.memory_space<vmem>>, vector<8x32xf32>
    tpu.vector_store %arg11[%c0_14, %c0_15], %12 {strides = array<i32>} : memref<8x32xf32, #tpu.memory_space<vmem>>, vector<8x32xf32>,
    %c0_16 = arith.constant 0 : index
    %c0_17 = arith.constant 0 : index
    %17 = vector.load %arg12[%c0_16, %c0_17] : memref<8x32xf32, #tpu.memory_space<vmem>>, vector<8x32xf32>
    tpu.vector_store %arg12[%c0_16, %c0_17], %13 {strides = array<i32>} : memref<8x32xf32, #tpu.memory_space<vmem>>, vector<8x32xf32>,
    %c0_18 = arith.constant 0 : index
    %c0_19 = arith.constant 0 : index
    %18 = vector.load %arg3[%c0_18, %c0_19] : memref<8x32xf32, #tpu.memory_space<vmem>>, vector<8x32xf32>
    %19 = arith.negf %11 : vector<8x32xf32>
    %20 = math.exp %19 : vector<8x32xf32>
    %cst_20 = arith.constant 1.000000e+00 : f32
    %21 = vector.broadcast %cst_20 : f32 to vector<8x32xf32>
    %22 = arith.addf %21, %20 : vector<8x32xf32>
    %23 = arith.divf %21, %22 : vector<8x32xf32>
    %24 = arith.mulf %18, %23 : vector<8x32xf32>
    %25 = arith.negf %10 : vector<8x32xf32>
    %26 = math.exp %25 : vector<8x32xf32>
    %cst_21 = arith.constant 1.000000e+00 : f32
    %27 = vector.broadcast %cst_21 : f32 to vector<8x32xf32>
    %28 = arith.addf %27, %26 : vector<8x32xf32>
    %29 = arith.divf %27, %28 : vector<8x32xf32>
    %30 = math.tanh %12 : vector<8x32xf32>
    %31 = arith.mulf %29, %30 : vector<8x32xf32>
    %32 = arith.addf %24, %31 : vector<8x32xf32>
    %33 = arith.negf %13 : vector<8x32xf32>
    %34 = math.exp %33 : vector<8x32xf32>
    %cst_22 = arith.constant 1.000000e+00 : f32
    %35 = vector.broadcast %cst_22 : f32 to vector<8x32xf32>
    %36 = arith.addf %35, %34 : vector<8x32xf32>
    %37 = arith.divf %35, %36 : vector<8x32xf32>
    %38 = math.tanh %32 : vector<8x32xf32>
    %39 = arith.mulf %37, %38 : vector<8x32xf32>
    %c0_23 = arith.constant 0 : index
    %c0_24 = arith.constant 0 : index
    %40 = vector.load %arg8[%c0_23, %c0_24] : memref<8x32xf32, #tpu.memory_space<vmem>>, vector<8x32xf32>
    tpu.vector_store %arg8[%c0_23, %c0_24], %32 {strides = array<i32>} : memref<8x32xf32, #tpu.memory_space<vmem>>, vector<8x32xf32>,
    %c0_25 = arith.constant 0 : index
    %c0_26 = arith.constant 0 : index
    %41 = vector.load %arg7[%c0_25, %c0_26] : memref<8x32xf32, #tpu.memory_space<vmem>>, vector<8x32xf32>
    tpu.vector_store %arg7[%c0_25, %c0_26], %39 {strides = array<i32>} : memref<8x32xf32, #tpu.memory_space<vmem>>, vector<8x32xf32>,
    return
  }
  func.func @transform_0(%arg0: i32) -> (i32, i32) {
    %c0_i32 = arith.constant 0 : i32
    %c0_i32_0 = arith.constant 0 : i32
    return %arg0, %c0_i32 : i32, i32
  }
  func.func @transform_1(%arg0: i32) -> (i32, i32) {
    %c0_i32 = arith.constant 0 : i32
    %c0_i32_0 = arith.constant 0 : i32
    return %arg0, %c0_i32 : i32, i32
  }
  func.func @transform_2(%arg0: i32) -> (i32, i32) {
    %c0_i32 = arith.constant 0 : i32
    %c0_i32_0 = arith.constant 0 : i32
    return %arg0, %c0_i32 : i32, i32
  }
  func.func @transform_3(%arg0: i32) -> (i32, i32) {
    %c0_i32 = arith.constant 0 : i32
    %c0_i32_0 = arith.constant 0 : i32
    %c0_i32_1 = arith.constant 0 : i32
    return %c0_i32, %c0_i32_0 : i32, i32
  }
  func.func @transform_4(%arg0: i32) -> (i32, i32) {
    %c0_i32 = arith.constant 0 : i32
    %c0_i32_0 = arith.constant 0 : i32
    %c0_i32_1 = arith.constant 0 : i32
    return %c0_i32, %c0_i32_0 : i32, i32
  }
  func.func @transform_5(%arg0: i32) -> (i32, i32) {
    %c0_i32 = arith.constant 0 : i32
    %c0_i32_0 = arith.constant 0 : i32
    %c0_i32_1 = arith.constant 0 : i32
    return %c0_i32, %c0_i32_0 : i32, i32
  }
  func.func @transform_6(%arg0: i32) -> (i32, i32) {
    %c0_i32 = arith.constant 0 : i32
    %c0_i32_0 = arith.constant 0 : i32
    return %arg0, %c0_i32 : i32, i32
  }
  func.func @transform_7(%arg0: i32) -> (i32, i32) {
    %c0_i32 = arith.constant 0 : i32
    %c0_i32_0 = arith.constant 0 : i32
    return %arg0, %c0_i32 : i32, i32
  }
  func.func @transform_8(%arg0: i32) -> (i32, i32) {
    %c0_i32 = arith.constant 0 : i32
    %c0_i32_0 = arith.constant 0 : i32
    return %arg0, %c0_i32 : i32, i32
  }
  func.func @transform_9(%arg0: i32) -> (i32, i32) {
    %c0_i32 = arith.constant 0 : i32
    %c0_i32_0 = arith.constant 0 : i32
    return %arg0, %c0_i32 : i32, i32
  }
  func.func @transform_10(%arg0: i32) -> (i32, i32) {
    %c0_i32 = arith.constant 0 : i32
    %c0_i32_0 = arith.constant 0 : i32
    return %arg0, %c0_i32 : i32, i32
  }
  func.func @transform_11(%arg0: i32) -> (i32, i32) {
    %c0_i32 = arith.constant 0 : i32
    %c0_i32_0 = arith.constant 0 : i32
    return %arg0, %c0_i32 : i32, i32
  }
}

</mosaic_0001>

<llo_original>
// kernel: lstm_cell_forward.1
$region0: #{lstm_cell_forward.1}
  #allocation0 [shape = 'u32[]', space=smem, size = 0x4, offset = 0x4, fixed_abs, tag = 'smem constant byte address 0x4 - core index']
  #allocation1 [shape = 'u32[144,128]{1,0:T(1,128)}', space=vmem, size = 0x12000, scoped, tag = 'internal scratch']
  %s0 = inlined_call_operand.hbm [shape: f32[8,16], index: 0, kind: input, shape index: {}]
  %s1 = inlined_call_operand.hbm [shape: f32[8,32], index: 1, kind: input, shape index: {}]
  %s2 = inlined_call_operand.hbm [shape: f32[8,32], index: 2, kind: input, shape index: {}]
  %s3 = inlined_call_operand.hbm [shape: f32[16,128], index: 3, kind: input, shape index: {}]
  %s4 = inlined_call_operand.hbm [shape: f32[32,128], index: 4, kind: input, shape index: {}]
  %s5 = inlined_call_operand.hbm [shape: f32[1,128], index: 5, kind: input, shape index: {}]
  %s6 = inlined_call_operand.hbm [shape: f32[8,32], index: 6, kind: output, shape index: {0}]
  %s7 = inlined_call_operand.hbm [shape: f32[8,32], index: 7, kind: output, shape index: {1}]
  %s8 = inlined_call_operand.hbm [shape: f32[8,32], index: 8, kind: output, shape index: {2}]
  %s9 = inlined_call_operand.hbm [shape: f32[8,32], index: 9, kind: output, shape index: {3}]
  %s10 = inlined_call_operand.hbm [shape: f32[8,32], index: 10, kind: output, shape index: {4}]
  %s11 = inlined_call_operand.hbm [shape: f32[8,32], index: 11, kind: output, shape index: {5}]
  %12 = xla_tuple %s6, %s7, %s8, %s9, %s10, %s11
  %s13 = sld [smem:[#allocation0]]
  $region98: #{lstm_cell_forward.1} parent=0
    _
  %s15 = ssub.s32 1, %s13
  %s16 = scalar_select 0, %s15, %s13
  $region1: #{lstm_cell_forward.1} parent=0
    #allocation2 [shape = 'u8[4096]{0}', space=vmem, size = 0x1000, scoped, tag = 'input window, operand 0, single buffered']
    #allocation3 [shape = 's32[1]{0}', space=sflag, size = 0x4, scoped, tag = 'scoped memory for lstm_cell_forward.1']
    #allocation4 [shape = 's32[1]{0}', space=sflag, size = 0x4, scoped, tag = 'scoped memory for lstm_cell_forward.1']
    #allocation5 [shape = 'u8[4096]{0}', space=vmem, size = 0x1000, scoped, tag = 'input window, operand 1, single buffered']
    #allocation6 [shape = 's32[1]{0}', space=sflag, size = 0x4, scoped, tag = 'scoped memory for lstm_cell_forward.1']
    #allocation7 [shape = 'u8[4096]{0}', space=vmem, size = 0x1000, scoped, tag = 'input window, operand 2, single buffered']
    #allocation8 [shape = 'u8[8192]{0}', space=vmem, size = 0x2000, scoped, tag = 'input window, operand 3, single buffered']
    #allocation9 [shape = 's32[1]{0}', space=sflag, size = 0x4, scoped, tag = 'scoped memory for lstm_cell_forward.1']
    #allocation10 [shape = 'u8[16384]{0}', space=vmem, size = 0x4000, scoped, tag = 'input window, operand 4, single buffered']
    #allocation11 [shape = 'u8[512]{0}', space=vmem, size = 0x400, scoped, tag = 'input window, operand 5, single buffered']
    #allocation12 [shape = 's32[1]{0}', space=sflag, size = 0x4, scoped, tag = 'scoped memory for lstm_cell_forward.1']
    #allocation13 [shape = 'u8[4096]{0}', space=vmem, size = 0x1000, scoped, tag = 'output window, operand 0, single buffered']
    #allocation14 [shape = 'u8[4096]{0}', space=vmem, size = 0x1000, scoped, tag = 'output window, operand 1, single buffered']
    #allocation15 [shape = 's32[1]{0}', space=sflag, size = 0x4, scoped, tag = 'scoped memory for lstm_cell_forward.1']
    #allocation16 [shape = 'u8[4096]{0}', space=vmem, size = 0x1000, scoped, tag = 'output window, operand 2, single buffered']
    #allocation17 [shape = 'u8[4096]{0}', space=vmem, size = 0x1000, scoped, tag = 'output window, operand 3, single buffered']
    #allocation18 [shape = 's32[1]{0}', space=sflag, size = 0x4, scoped, tag = 'scoped memory for lstm_cell_forward.1']
    #allocation19 [shape = 'u8[4096]{0}', space=vmem, size = 0x1000, scoped, tag = 'output window, operand 4, single buffered']
    #allocation20 [shape = 'u8[4096]{0}', space=vmem, size = 0x1000, scoped, tag = 'output window, operand 5, single buffered']
    #allocation21 [shape = 's32[1]{0}', space=sflag, size = 0x4, scoped, tag = 'scoped memory for lstm_cell_forward.1']
    %17 = vsyncpa [#allocation3], 0
    %18 = vsyncpa [#allocation6], 0
    %19 = vsyncpa [#allocation9], 0
    %20 = vsyncpa [#allocation12], 0
    %21 = vsyncpa [#allocation4], 0
    %22 = vsyncpa [#allocation15], 0
    %23 = vsyncpa [#allocation18], 0
    %24 = vsyncpa [#allocation21], 0
    // Predicated region
    $region2: #{lstm_cell_forward.1} parent=1 // pred_check
      _
    $region3: #{lstm_cell_forward.1} parent=1 // pred_check_branch
      %26 = sbr.rel (0) target = $region5
    $region4: #{lstm_cell_forward.1} parent=1 // pred_region
      %s28 = ssub.s32 128, 128
      %29 = vsyncadd [#allocation3], %s28
      %s31 = sshll.u32 [#allocation2], 4
      %s32 = int_to_ptr.vmem [resolvable:$true] %s31
      %34 = dma.hbm_to_vmem [thread:$0]  %s0, 128, %s32, [#allocation3]
    $region5: #{lstm_cell_forward.1} parent=1 // pred_fallthru
      _
    // Predicated region
    $region6: #{lstm_cell_forward.1} parent=1 // pred_check
      _
    $region7: #{lstm_cell_forward.1} parent=1 // pred_check_branch
      %36 = sbr.rel (0) target = $region9
    $region8: #{lstm_cell_forward.1} parent=1 // pred_region
      %s38 = ssub.s32 128, 128
      %39 = vsyncadd [#allocation6], %s38
      %s41 = sshll.u32 [#allocation5], 4
      %s42 = int_to_ptr.vmem [resolvable:$true] %s41
      %44 = dma.hbm_to_vmem [thread:$0]  %s1, 128, %s42, [#allocation6]
    $region9: #{lstm_cell_forward.1} parent=1 // pred_fallthru
      _
    // Predicated region
    $region10: #{lstm_cell_forward.1} parent=1 // pred_check
      _
    $region11: #{lstm_cell_forward.1} parent=1 // pred_check_branch
      %46 = sbr.rel (0) target = $region13
    $region12: #{lstm_cell_forward.1} parent=1 // pred_region
      %s48 = ssub.s32 128, 128
      %49 = vsyncadd [#allocation6], %s48
      %s51 = sshll.u32 [#allocation7], 4
      %s52 = int_to_ptr.vmem [resolvable:$true] %s51
      %54 = dma.hbm_to_vmem [thread:$0]  %s2, 128, %s52, [#allocation6]
    $region13: #{lstm_cell_forward.1} parent=1 // pred_fallthru
      _
    // Predicated region
    $region14: #{lstm_cell_forward.1} parent=1 // pred_check
      _
    $region15: #{lstm_cell_forward.1} parent=1 // pred_check_branch
      %56 = sbr.rel (0) target = $region17
    $region16: #{lstm_cell_forward.1} parent=1 // pred_region
      %s58 = ssub.s32 256, 256
      %59 = vsyncadd [#allocation9], %s58
      %s60 = sshll.u32 [#allocation8], 4
      %s61 = int_to_ptr.vmem [resolvable:$true] %s60
      %66 = dma.hbm_to_vmem [thread:$0]  %s3, 256, %s61, [#allocation9], 128, 128, 8
    $region17: #{lstm_cell_forward.1} parent=1 // pred_fallthru
      _
    // Predicated region
    $region18: #{lstm_cell_forward.1} parent=1 // pred_check
      _
    $region19: #{lstm_cell_forward.1} parent=1 // pred_check_branch
      %68 = sbr.rel (0) target = $region21
    $region20: #{lstm_cell_forward.1} parent=1 // pred_region
      %s70 = ssub.s32 512, 512
      %71 = vsyncadd [#allocation9], %s70
      %s72 = sshll.u32 [#allocation10], 4
      %s73 = int_to_ptr.vmem [resolvable:$true] %s72
      %78 = dma.hbm_to_vmem [thread:$0]  %s4, 512, %s73, [#allocation9], 128, 128, 8
    $region21: #{lstm_cell_forward.1} parent=1 // pred_fallthru
      _
    // Predicated region
    $region22: #{lstm_cell_forward.1} parent=1 // pred_check
      _
    $region23: #{lstm_cell_forward.1} parent=1 // pred_check_branch
      %80 = sbr.rel (0) target = $region25
    $region24: #{lstm_cell_forward.1} parent=1 // pred_region
      %s82 = ssub.s32 16, 16
      %83 = vsyncadd [#allocation12], %s82
      %s85 = sshll.u32 [#allocation11], 4
      %s86 = int_to_ptr.vmem [resolvable:$true] %s85
      %88 = dma.hbm_to_vmem [thread:$0]  %s5, 16, %s86, [#allocation12]
    $region25: #{lstm_cell_forward.1} parent=1 // pred_fallthru
      _
    // Predicated region
    $region26: #{lstm_cell_forward.1} parent=1 // pred_check
      _
    $region27: #{lstm_cell_forward.1} parent=1 // pred_check_branch
      %90 = sbr.rel (0) target = $region29
    $region28: #{lstm_cell_forward.1} parent=1 // pred_region
      %91 = dma.done [#allocation3], 128
    $region29: #{lstm_cell_forward.1} parent=1 // pred_fallthru
      _
    // Predicated region
    $region30: #{lstm_cell_forward.1} parent=1 // pred_check
      _
    $region31: #{lstm_cell_forward.1} parent=1 // pred_check_branch
      %93 = sbr.rel (0) target = $region33
    $region32: #{lstm_cell_forward.1} parent=1 // pred_region
      %94 = dma.done [#allocation6], 128
    $region33: #{lstm_cell_forward.1} parent=1 // pred_fallthru
      _
    // Predicated region
    $region34: #{lstm_cell_forward.1} parent=1 // pred_check
      _
    $region35: #{lstm_cell_forward.1} parent=1 // pred_check_branch
      %96 = sbr.rel (0) target = $region37
    $region36: #{lstm_cell_forward.1} parent=1 // pred_region
      %97 = dma.done [#allocation6], 128
    $region37: #{lstm_cell_forward.1} parent=1 // pred_fallthru
      _
    // Predicated region
    $region38: #{lstm_cell_forward.1} parent=1 // pred_check
      _
    $region39: #{lstm_cell_forward.1} parent=1 // pred_check_branch
      %99 = sbr.rel (0) target = $region41
    $region40: #{lstm_cell_forward.1} parent=1 // pred_region
      %100 = dma.done [#allocation9], 256
    $region41: #{lstm_cell_forward.1} parent=1 // pred_fallthru
      _
    // Predicated region
    $region42: #{lstm_cell_forward.1} parent=1 // pred_check
      _
    $region43: #{lstm_cell_forward.1} parent=1 // pred_check_branch
      %102 = sbr.rel (0) target = $region45
    $region44: #{lstm_cell_forward.1} parent=1 // pred_region
      %103 = dma.done [#allocation9], 512
    $region45: #{lstm_cell_forward.1} parent=1 // pred_fallthru
      _
    // Predicated region
    $region46: #{lstm_cell_forward.1} parent=1 // pred_check
      _
    $region47: #{lstm_cell_forward.1} parent=1 // pred_check_branch
      %105 = sbr.rel (0) target = $region49
    $region48: #{lstm_cell_forward.1} parent=1 // pred_region
      %106 = dma.done [#allocation12], 16
    $region49: #{lstm_cell_forward.1} parent=1 // pred_fallthru
      _
    %v107 = vld [vmem:[#allocation2] sm:$0xff]
    %v108 = vld [vmem:[#allocation8] sm:$0xff]
    %v109 = vld [vmem:[#allocation8 + $0x8] sm:$0xff]
    %v110 = vld [vmem:[#allocation5] sm:$0xff]
    %v111 = vld [vmem:[#allocation10] sm:$0xff]
    %v112 = vld [vmem:[#allocation10 + $0x8] sm:$0xff]
    %v113 = vld [vmem:[#allocation10 + $0x10] sm:$0xff]
    %v114 = vld [vmem:[#allocation10 + $0x18] sm:$0xff]
    %vm115 = vcmask 261120
    %v117 = vsel %vm115, %v110, 0
    %119 = vmatprep.subr.mxu0 0.0
    %120 = vmatpush1.msra.mxu0 %v111
    %121 = vmatprep.subr.mxu0 0.0
    %122 = vmatpush1.msra.mxu0 %v112
    %123 = vmatprep.subr.mxu0 0.0
    %124 = vmatpush1.msra.mxu0 %v113
    %125 = vmatprep.subr.mxu0 0.0
    %126 = vmatpush1.msra.mxu0 %v114
    %127 = vmatprep.subr.mxu0 0.0
    %128 = vmatpush1.msra.mxu0 0.0
    %129 = vmatprep.subr.mxu0 0.0
    %130 = vmatpush1.msra.mxu0 0.0
    %131 = vmatprep.subr.mxu0 0.0
    %132 = vmatpush1.msra.mxu0 0.0
    %133 = vmatprep.subr.mxu0 0.0
    %134 = vmatpush1.msra.mxu0 0.0
    %135 = vmatprep.subr.mxu0 0.0
    %136 = vmatpush1.msra.mxu0 0.0
    %137 = vmatprep.subr.mxu0 0.0
    %138 = vmatpush1.msra.mxu0 0.0
    %139 = vmatprep.subr.mxu0 0.0
    %140 = vmatpush1.msra.mxu0 0.0
    %141 = vmatprep.subr.mxu0 0.0
    %142 = vmatpush1.msra.mxu0 0.0
    %143 = vmatprep.subr.mxu0 0.0
    %144 = vmatpush1.msra.mxu0 0.0
    %145 = vmatprep.subr.mxu0 0.0
    %146 = vmatpush1.msra.mxu0 0.0
    %147 = vmatprep.subr.mxu0 0.0
    %148 = vmatpush1.msra.mxu0 0.0
    %149 = vmatprep.subr.mxu0 0.0
    %150 = vmatpush1.msra.mxu0 0.0
    %151 = vmatprep.subr.mxu0 0.0
    %152 = vmatpush1.msra.mxu0 0.0
    %153 = vmatprep.subr.mxu0 0.0
    %154 = vmatpush1.msra.mxu0 0.0
    %155 = vmatprep.subr.mxu0 0.0
    %156 = vmatpush1.msra.mxu0 0.0
    %157 = vmatprep.subr.mxu0 0.0
    %158 = vmatpush1.msra.mxu0 0.0
    %159 = vmatprep.subr.mxu0 0.0
    %160 = vmatpush1.msra.mxu0 0.0
    %161 = vmatprep.subr.mxu0 0.0
    %162 = vmatpush1.msra.mxu0 0.0
    %163 = vmatprep.subr.mxu0 0.0
    %164 = vmatpush1.msra.mxu0 0.0
    %165 = vmatprep.subr.mxu0 0.0
    %166 = vmatpush1.msra.mxu0 0.0
    %167 = vmatprep.subr.mxu0 0.0
    %168 = vmatpush1.msra.mxu0 0.0
    %169 = vmatprep.subr.mxu0 0.0
    %170 = vmatpush1.msra.mxu0 0.0
    %171 = vmatprep.subr.mxu0 0.0
    %172 = vmatpush1.msra.mxu0 0.0
    %173 = vmatprep.subr.mxu0 0.0
    %174 = vmatpush1.msra.mxu0 0.0
    %175 = vmatprep.subr.mxu0 0.0
    %176 = vmatpush1.msra.mxu0 0.0
    %177 = vmatprep.subr.mxu0 0.0
    %178 = vmatpush1.msra.mxu0 0.0
    %179 = vmatprep.subr.mxu0 0.0
    %180 = vmatpush1.msra.mxu0 0.0
    %181 = vmatprep.subr.mxu0 0.0
    %182 = vmatpush1.msra.mxu0 0.0
    %183 = vmatprep.mubr.f32.mxu0 0.0
    %184 = vmatmul.mubr.f32.gmra.mrb[0].mxu0 %v117
    %v185 = vpop.f32.mrb[0].mxu0
    %v186 = vadd.f32 0.0, %v185
    %v187 = vpop.f32.mrb[0].mxu0
    %188 = vdwg.mxu0
    %vm189 = vcmask 130048
    %v191 = vsel %vm189, %v107, 0
    %193 = vmatprep.subr.mxu0 0.0
    %194 = vmatpush1.msra.mxu0 %v108
    %195 = vmatprep.subr.mxu0 0.0
    %196 = vmatpush1.msra.mxu0 %v109
    %197 = vmatprep.subr.mxu0 0.0
    %198 = vmatpush1.msra.mxu0 0.0
    %199 = vmatprep.subr.mxu0 0.0
    %200 = vmatpush1.msra.mxu0 0.0
    %201 = vmatprep.subr.mxu0 0.0
    %202 = vmatpush1.msra.mxu0 0.0
    %203 = vmatprep.subr.mxu0 0.0
    %204 = vmatpush1.msra.mxu0 0.0
    %205 = vmatprep.subr.mxu0 0.0
    %206 = vmatpush1.msra.mxu0 0.0
    %207 = vmatprep.subr.mxu0 0.0
    %208 = vmatpush1.msra.mxu0 0.0
    %209 = vmatprep.subr.mxu0 0.0
    %210 = vmatpush1.msra.mxu0 0.0
    %211 = vmatprep.subr.mxu0 0.0
    %212 = vmatpush1.msra.mxu0 0.0
    %213 = vmatprep.subr.mxu0 0.0
    %214 = vmatpush1.msra.mxu0 0.0
    %215 = vmatprep.subr.mxu0 0.0
    %216 = vmatpush1.msra.mxu0 0.0
    %217 = vmatprep.subr.mxu0 0.0
    %218 = vmatpush1.msra.mxu0 0.0
    %219 = vmatprep.subr.mxu0 0.0
    %220 = vmatpush1.msra.mxu0 0.0
    %221 = vmatprep.subr.mxu0 0.0
    %222 = vmatpush1.msra.mxu0 0.0
    %223 = vmatprep.subr.mxu0 0.0
    %224 = vmatpush1.msra.mxu0 0.0
    %225 = vmatprep.subr.mxu0 0.0
    %226 = vmatpush1.msra.mxu0 0.0
    %227 = vmatprep.subr.mxu0 0.0
    %228 = vmatpush1.msra.mxu0 0.0
    %229 = vmatprep.subr.mxu0 0.0
    %230 = vmatpush1.msra.mxu0 0.0
    %231 = vmatprep.subr.mxu0 0.0
    %232 = vmatpush1.msra.mxu0 0.0
    %233 = vmatprep.subr.mxu0 0.0
    %234 = vmatpush1.msra.mxu0 0.0
    %235 = vmatprep.subr.mxu0 0.0
    %236 = vmatpush1.msra.mxu0 0.0
    %237 = vmatprep.subr.mxu0 0.0
    %238 = vmatpush1.msra.mxu0 0.0
    %239 = vmatprep.subr.mxu0 0.0
    %240 = vmatpush1.msra.mxu0 0.0
    %241 = vmatprep.subr.mxu0 0.0
    %242 = vmatpush1.msra.mxu0 0.0
    %243 = vmatprep.subr.mxu0 0.0
    %244 = vmatpush1.msra.mxu0 0.0
    %245 = vmatprep.subr.mxu0 0.0
    %246 = vmatpush1.msra.mxu0 0.0
    %247 = vmatprep.subr.mxu0 0.0
    %248 = vmatpush1.msra.mxu0 0.0
    %249 = vmatprep.subr.mxu0 0.0
    %250 = vmatpush1.msra.mxu0 0.0
    %251 = vmatprep.subr.mxu0 0.0
    %252 = vmatpush1.msra.mxu0 0.0
    %253 = vmatprep.subr.mxu0 0.0
    %254 = vmatpush1.msra.mxu0 0.0
    %255 = vmatprep.subr.mxu0 0.0
    %256 = vmatpush1.msra.mxu0 0.0
    %257 = vmatprep.mubr.f32.mxu0 0.0
    %258 = vmatmul.mubr.f32.gmra.mrb[0].mxu0 %v191
    %v259 = vpop.f32.mrb[0].mxu0
    %v260 = vadd.f32 %v186, %v259
    %v261 = vpop.f32.mrb[0].mxu0
    %262 = vdwg.mxu0
    %v263 = vld [vmem:[#allocation11] sm:$0x1]
    %v265 = vlaneseq
    %v266 = vshrl.u32 %v265, 7
    %v267 = vsub.s32 0, %v266
    %v268 = vrot.slane %v263, %v267
    %v270 = vadd.f32 %v260, %v268
    %271 = vst.msk [vmem:[#allocation16] sm:$0xff] %vm115, %v270
    %273 = vrot.lane.b32.xlu0 %v270, 96
    %v274 = vpop.permute.xlu0 %273
    %276 = vst.msk [vmem:[#allocation17] sm:$0xff] %vm115, %v274
    %277 = vrot.lane.b32.xlu0 %v270, 64
    %v278 = vpop.permute.xlu0 %277
    %280 = vst.msk [vmem:[#allocation19] sm:$0xff] %vm115, %v278
    %281 = vrot.lane.b32.xlu0 %v270, 32
    %v282 = vpop.permute.xlu0 %281
    %284 = vst.msk [vmem:[#allocation20] sm:$0xff] %vm115, %v282
    %v285 = vld [vmem:[#allocation7] sm:$0xff]
    %v286 = vxor.u32 %v270, 2147483648
    %v287 = vmul.f32 %v286, 1.442695
    %v288 = vpow.pop %v287
    %v289 = vadd.f32 %v288, 1.0
    %v290 = vrcp.pop %v289
    %v291 = vmul.f32 1.0, %v290
    %293 = vrot.lane.b32.xlu0 %v291, 96
    %v294 = vpop.permute.xlu0 %293
    %v296 = vmul.f32 %v285, %v294
    %v297 = vtanh.pop %v270
    %299 = vrot.lane.b32.xlu0 %v297, 64
    %v300 = vpop.permute.xlu0 %299
    %v302 = vmul.f32 %v291, %v300
    %v303 = vadd.f32 %v296, %v302
    %v304 = vtanh.pop %v303
    %306 = vrot.lane.b32.xlu0 %v304, 96
    %v307 = vpop.permute.xlu0 %306
    %v309 = vmul.f32 %v291, %v307
    %310 = vst.msk [vmem:[#allocation14] sm:$0xff] %vm115, %v303
    %312 = vrot.lane.b32.xlu0 %v309, 32
    %v313 = vpop.permute.xlu0 %312
    %315 = vst.msk [vmem:[#allocation13] sm:$0xff] %vm115, %v313
    // Predicated region
    $region50: #{lstm_cell_forward.1} parent=1 // pred_check
      _
    $region51: #{lstm_cell_forward.1} parent=1 // pred_check_branch
      %317 = sbr.rel (0) target = $region53
    $region52: #{lstm_cell_forward.1} parent=1 // pred_region
      %s319 = ssub.s32 128, 128
      %320 = vsyncadd [#allocation4], %s319
      %s322 = sshll.u32 [#allocation13], 4
      %s323 = int_to_ptr.vmem [resolvable:$true] %s322
      %325 = dma.vmem_to_hbm [thread:$0]  %s323, 128, %s6, [#allocation4]
    $region53: #{lstm_cell_forward.1} parent=1 // pred_fallthru
      _
    // Predicated region
    $region54: #{lstm_cell_forward.1} parent=1 // pred_check
      _
    $region55: #{lstm_cell_forward.1} parent=1 // pred_check_branch
      %327 = sbr.rel (0) target = $region57
    $region56: #{lstm_cell_forward.1} parent=1 // pred_region
      %s329 = ssub.s32 128, 128
      %330 = vsyncadd [#allocation15], %s329
      %s332 = sshll.u32 [#allocation14], 4
      %s333 = int_to_ptr.vmem [resolvable:$true] %s332
      %335 = dma.vmem_to_hbm [thread:$0]  %s333, 128, %s7, [#allocation15]
    $region57: #{lstm_cell_forward.1} parent=1 // pred_fallthru
      _
    // Predicated region
    $region58: #{lstm_cell_forward.1} parent=1 // pred_check
      _
    $region59: #{lstm_cell_forward.1} parent=1 // pred_check_branch
      %337 = sbr.rel (0) target = $region61
    $region60: #{lstm_cell_forward.1} parent=1 // pred_region
      %s339 = ssub.s32 128, 128
      %340 = vsyncadd [#allocation15], %s339
      %s342 = sshll.u32 [#allocation16], 4
      %s343 = int_to_ptr.vmem [resolvable:$true] %s342
      %345 = dma.vmem_to_hbm [thread:$0]  %s343, 128, %s8, [#allocation15]
    $region61: #{lstm_cell_forward.1} parent=1 // pred_fallthru
      _
    // Predicated region
    $region62: #{lstm_cell_forward.1} parent=1 // pred_check
      _
    $region63: #{lstm_cell_forward.1} parent=1 // pred_check_branch
      %347 = sbr.rel (0) target = $region65
    $region64: #{lstm_cell_forward.1} parent=1 // pred_region
      %s349 = ssub.s32 128, 128
      %350 = vsyncadd [#allocation18], %s349
      %s352 = sshll.u32 [#allocation17], 4
      %s353 = int_to_ptr.vmem [resolvable:$true] %s352
      %355 = dma.vmem_to_hbm [thread:$0]  %s353, 128, %s9, [#allocation18]
    $region65: #{lstm_cell_forward.1} parent=1 // pred_fallthru
      _
    // Predicated region
    $region66: #{lstm_cell_forward.1} parent=1 // pred_check
      _
    $region67: #{lstm_cell_forward.1} parent=1 // pred_check_branch
      %357 = sbr.rel (0) target = $region69
    $region68: #{lstm_cell_forward.1} parent=1 // pred_region
      %s359 = ssub.s32 128, 128
      %360 = vsyncadd [#allocation18], %s359
      %s362 = sshll.u32 [#allocation19], 4
      %s363 = int_to_ptr.vmem [resolvable:$true] %s362
      %365 = dma.vmem_to_hbm [thread:$0]  %s363, 128, %s10, [#allocation18]
    $region69: #{lstm_cell_forward.1} parent=1 // pred_fallthru
      _
    // Predicated region
    $region70: #{lstm_cell_forward.1} parent=1 // pred_check
      _
    $region71: #{lstm_cell_forward.1} parent=1 // pred_check_branch
      %367 = sbr.rel (0) target = $region73
    $region72: #{lstm_cell_forward.1} parent=1 // pred_region
      %s369 = ssub.s32 128, 128
      %370 = vsyncadd [#allocation21], %s369
      %s372 = sshll.u32 [#allocation20], 4
      %s373 = int_to_ptr.vmem [resolvable:$true] %s372
      %375 = dma.vmem_to_hbm [thread:$0]  %s373, 128, %s11, [#allocation21]
    $region73: #{lstm_cell_forward.1} parent=1 // pred_fallthru
      _
    // Predicated region
    $region74: #{lstm_cell_forward.1} parent=1 // pred_check
      _
    $region75: #{lstm_cell_forward.1} parent=1 // pred_check_branch
      %377 = sbr.rel (0) target = $region77
    $region76: #{lstm_cell_forward.1} parent=1 // pred_region
      %378 = dma.done [#allocation4], 128
    $region77: #{lstm_cell_forward.1} parent=1 // pred_fallthru
      _
    // Predicated region
    $region78: #{lstm_cell_forward.1} parent=1 // pred_check
      _
    $region79: #{lstm_cell_forward.1} parent=1 // pred_check_branch
      %380 = sbr.rel (0) target = $region81
    $region80: #{lstm_cell_forward.1} parent=1 // pred_region
      %381 = dma.done [#allocation15], 128
    $region81: #{lstm_cell_forward.1} parent=1 // pred_fallthru
      _
    // Predicated region
    $region82: #{lstm_cell_forward.1} parent=1 // pred_check
      _
    $region83: #{lstm_cell_forward.1} parent=1 // pred_check_branch
      %383 = sbr.rel (0) target = $region85
    $region84: #{lstm_cell_forward.1} parent=1 // pred_region
      %384 = dma.done [#allocation15], 128
    $region85: #{lstm_cell_forward.1} parent=1 // pred_fallthru
      _
    // Predicated region
    $region86: #{lstm_cell_forward.1} parent=1 // pred_check
      _
    $region87: #{lstm_cell_forward.1} parent=1 // pred_check_branch
      %386 = sbr.rel (0) target = $region89
    $region88: #{lstm_cell_forward.1} parent=1 // pred_region
      %387 = dma.done [#allocation18], 128
    $region89: #{lstm_cell_forward.1} parent=1 // pred_fallthru
      _
    // Predicated region
    $region90: #{lstm_cell_forward.1} parent=1 // pred_check
      _
    $region91: #{lstm_cell_forward.1} parent=1 // pred_check_branch
      %389 = sbr.rel (0) target = $region93
    $region92: #{lstm_cell_forward.1} parent=1 // pred_region
      %390 = dma.done [#allocation18], 128
    $region93: #{lstm_cell_forward.1} parent=1 // pred_fallthru
      _
    // Predicated region
    $region94: #{lstm_cell_forward.1} parent=1 // pred_check
      _
    $region95: #{lstm_cell_forward.1} parent=1 // pred_check_branch
      %392 = sbr.rel (0) target = $region97
    $region96: #{lstm_cell_forward.1} parent=1 // pred_region
      %393 = dma.done [#allocation21], 128
    $region97: #{lstm_cell_forward.1} parent=1 // pred_fallthru
      _
    %394 = vsyncpa [#allocation3], 1
    %395 = vsyncpa [#allocation6], 1
    %396 = vsyncpa [#allocation9], 1
    %397 = vsyncpa [#allocation12], 1
    %398 = vsyncpa [#allocation4], 1
    %399 = vsyncpa [#allocation15], 1
    %400 = vsyncpa [#allocation18], 1
    %401 = vsyncpa [#allocation21], 1

</llo_original>
